<compile_context>
chip_gen: v5e
topology: v5e:2x2
jax: 0.10.0
libtpu: 0.0.40
codegen_flags: <defaults>
</compile_context>

<pallas_src>
import functools
import math

import jax
import jax.numpy as jnp
from jax.experimental import pallas as pl
from jax.experimental.pallas import tpu as pltpu


# ------------------------------------------------------------------
# Pallas kernel 1: tiled GEMM + bias (+ ReLU) for the conv stem (im2col).
# ------------------------------------------------------------------
def _matmul_bias_kernel(x_ref, w_ref, b_ref, o_ref, *, relu):
    acc = jnp.dot(x_ref[...], w_ref[...], preferred_element_type=jnp.float32)
    acc = acc + b_ref[...]
    if relu:
        acc = jnp.maximum(acc, 0.0)
    o_ref[...] = acc.astype(o_ref.dtype)


def matmul_bias(x, w, b, relu=False, tm_max=512):
    """y = [relu](x @ w + b).  x:(M,K), w:(K,N), b:(N,)."""
    M, K = x.shape
    K2, N = w.shape
    assert K == K2
    # M-tile: large enough to hide the patch DMA behind the MXU, small enough
    # that 2*(tm*K + tm*N)*4 + K*N*4 stays well inside scoped VMEM on every
    # generation (worst case in this config ~5 MiB).
    tm = M if M <= tm_max else tm_max        # tm_max is a multiple of 8
    grid = (pl.cdiv(M, tm),)
    # NOTE: conv1 (N=64) and conv5 (N=32) outputs are not lane-dense (<128);
    # padding Cout to 128 would trade masked stores for 2x store bytes — not
    # worth it at these sizes, so left as-is.
    return pl.pallas_call(
        functools.partial(_matmul_bias_kernel, relu=relu),
        out_shape=jax.ShapeDtypeStruct((M, N), jnp.float32),
        grid=grid,
        in_specs=[
            pl.BlockSpec((tm, K), lambda i: (i, 0)),   # streamed / pipelined
            pl.BlockSpec((K, N), lambda i: (0, 0)),    # resident weights
            pl.BlockSpec((1, N), lambda i: (0, 0)),    # resident bias
        ],
        out_specs=pl.BlockSpec((tm, N), lambda i: (i, 0)),
        compiler_params=pltpu.CompilerParams(
            dimension_semantics=("parallel",),         # v7x: 2 TCs split M tiles
            vmem_limit_bytes=32 * 1024 * 1024,         # explicit (v5e default is 16 MiB)
        ),
    )(x, w, b.reshape(1, N))


# ------------------------------------------------------------------
# Pallas kernel 2: one CrossAttentionBlock (gridded over batch).
# ------------------------------------------------------------------
def _erf(x):
    # Abramowitz & Stegun 7.1.26 (max abs err ~1.5e-7), built from ops that
    # lower on Mosaic (exp/abs/where).  PyTorch nn.GELU() uses exact erf GELU.
    a1, a2, a3, a4, a5 = 0.254829592, -0.284496736, 1.421413741, -1.453152027, 1.061405429
    p = 0.3275911
    sgn = jnp.where(x >= 0.0, 1.0, -1.0)
    ax = jnp.abs(x)
    t = 1.0 / (1.0 + p * ax)
    poly = ((((a5 * t + a4) * t + a3) * t + a2) * t + a1) * t
    return sgn * (1.0 - poly * jnp.exp(-ax * ax))


def _gelu_exact(x):
    return 0.5 * x * (1.0 + _erf(x * 0.7071067811865476))


def _layernorm(x, w, b, eps=1e-5):
    mu = jnp.mean(x, axis=-1, keepdims=True)
    var = jnp.mean(jnp.square(x - mu), axis=-1, keepdims=True)
    return (x - mu) * jax.lax.rsqrt(var + eps) * w + b


# Row layout of the packed per-layer vector operand (rows are zero-padded to
# width 4*D; only _FC1_B uses the full 4*D columns).
_LN1Q_W, _LN1Q_B, _LN1KV_W, _LN1KV_B = 0, 1, 2, 3
_BQ, _BK, _BV, _BO = 4, 5, 6, 7
_LN2_W, _LN2_B, _FC1_B, _FC2_B = 8, 9, 10, 11
_N_VEC = 12


def _cross_attn_block_kernel(q_ref, kv_ref, mats_ref, fc2_ref, vecs_ref,
                             o_ref, attn_buf, *, num_heads):
    qb = q_ref[0]     # (Lq, D)
    kvb = kv_ref[0]   # (Lkv, D)
    D = qb.shape[-1]
    Dh = D // num_heads
    scale = 1.0 / math.sqrt(Dh)

    def vec(row, width=D):
        return vecs_ref[row:row + 1, :width]          # (1, width)

    qn = _layernorm(qb, vec(_LN1Q_W), vec(_LN1Q_B))
    kvn = _layernorm(kvb, vec(_LN1KV_W), vec(_LN1KV_B))

    # Packed weight matrix: [Wq^T | Wk^T | Wv^T | Wo^T | fc1^T], shape (D, 8D).
    wq = mats_ref[:, 0 * D:1 * D]
    wk = mats_ref[:, 1 * D:2 * D]
    wv = mats_ref[:, 2 * D:3 * D]
    wo = mats_ref[:, 3 * D:4 * D]
    fc1 = mats_ref[:, 4 * D:8 * D]

    Q = jnp.dot(qn, wq, preferred_element_type=jnp.float32) + vec(_BQ)
    K = jnp.dot(kvn, wk, preferred_element_type=jnp.float32) + vec(_BK)
    V = jnp.dot(kvn, wv, preferred_element_type=jnp.float32) + vec(_BV)

    # Per-head softmax(QK^T)V written into a VMEM concat buffer; the output
    # projection is then ONE (Lq, D) @ (D, D) matmul.
    for h in range(num_heads):
        Qh = Q[:, h * Dh:(h + 1) * Dh] * scale
        Kh = K[:, h * Dh:(h + 1) * Dh]
        Vh = V[:, h * Dh:(h + 1) * Dh]
        s = jax.lax.dot_general(Qh, Kh, (((1,), (1,)), ((), ())),
                                preferred_element_type=jnp.float32)   # (Lq, Lkv)
        m = jnp.max(s, axis=-1, keepdims=True)
        e = jnp.exp(s - m)
        # Exact division kept (vs. pl.reciprocal approx) for numerics parity
        # with the PyTorch softmax reference.
        p = e / jnp.sum(e, axis=-1, keepdims=True)
        attn_buf[:, h * Dh:(h + 1) * Dh] = jnp.dot(
            p, Vh, preferred_element_type=jnp.float32)

    attended = jnp.dot(attn_buf[...], wo,
                       preferred_element_type=jnp.float32) + vec(_BO)

    x = qb + attended
    xn = _layernorm(x, vec(_LN2_W), vec(_LN2_B))
    h1 = _gelu_exact(jnp.dot(xn, fc1, preferred_element_type=jnp.float32)
                     + vec(_FC1_B, 4 * D))
    x = x + jnp.dot(h1, fc2_ref[...], preferred_element_type=jnp.float32) + vec(_FC2_B)
    o_ref[0] = x.astype(o_ref.dtype)


def cross_attn_block(q, kv, layer_params, num_heads):
    B, Lq, D = q.shape
    Lkv = kv.shape[1]
    mats, fc2_t, vecs = layer_params

    in_specs = [
        pl.BlockSpec((1, Lq, D), lambda b: (b, 0, 0)),
        pl.BlockSpec((1, Lkv, D), lambda b: (b, 0, 0)),
        pl.BlockSpec(mats.shape, lambda b: (0, 0)),    # (D, 8D) resident
        pl.BlockSpec(fc2_t.shape, lambda b: (0, 0)),   # (4D, D) resident
        pl.BlockSpec(vecs.shape, lambda b: (0, 0)),    # (12, 4D) resident
    ]
    return pl.pallas_call(
        functools.partial(_cross_attn_block_kernel, num_heads=num_heads),
        out_shape=jax.ShapeDtypeStruct((B, Lq, D), jnp.float32),
        grid=(B,),
        in_specs=in_specs,
        out_specs=pl.BlockSpec((1, Lq, D), lambda b: (b, 0, 0)),
        scratch_shapes=[pltpu.VMEM((Lq, D), jnp.float32)],   # head-concat buffer
        compiler_params=pltpu.CompilerParams(
            dimension_semantics=("parallel",),   # v7x: one batch element per TC
            vmem_limit_bytes=32 * 1024 * 1024,
        ),
    )(q, kv, mats, fc2_t, vecs)


# ------------------------------------------------------------------
# Glue: im2col, conv stem, full forward.
# ------------------------------------------------------------------
def im2col(x_nhwc, kh, kw, stride, ph, pw):
    B, H, W, C = x_nhwc.shape
    xp = jnp.pad(x_nhwc, ((0, 0), (ph, ph), (pw, pw), (0, 0)))
    Ho = (H + 2 * ph - kh) // stride + 1
    Wo = (W + 2 * pw - kw) // stride + 1
    cols = []
    for i in range(kh):
        for j in range(kw):
            cols.append(xp[:, i:i + stride * (Ho - 1) + 1:stride,
                           j:j + stride * (Wo - 1) + 1:stride, :])
    patches = jnp.stack(cols, axis=3)               # (B, Ho, Wo, kh*kw, C)
    return patches.reshape(B, Ho, Wo, kh * kw * C), Ho, Wo


def conv_stem(x_nchw, conv_params):
    x = jnp.transpose(x_nchw, (0, 2, 3, 1))          # NCHW -> NHWC
    for (w_mat, b, kh, kw, stride, ph, pw, relu) in conv_params:
        B = x.shape[0]
        patches, Ho, Wo = im2col(x, kh, kw, stride, ph, pw)
        y = matmul_bias(patches.reshape(B * Ho * Wo, -1), w_mat, b, relu=relu)
        x = y.reshape(B, Ho, Wo, w_mat.shape[1])
    return jnp.transpose(x, (0, 3, 1, 2))            # NHWC -> NCHW


def forward(frame_t, frame_tp1, params):
    feat_t = conv_stem(frame_t, params["conv"])       # (B, D, H, W)
    feat_tp1 = conv_stem(frame_tp1, params["conv"])
    B, C, H, W = feat_tp1.shape
    tokens_q = feat_tp1.reshape(B, C, H * W).transpose(0, 2, 1)   # (B, HW, D)
    tokens_kv = feat_t.reshape(B, C, H * W).transpose(0, 2, 1)
    cls = jnp.broadcast_to(params["cls_token"], (B, 1, C))
    tokens_q = jnp.concatenate([cls, tokens_q], axis=1)
    tokens_q = tokens_q + params["pos_embed"][:, :tokens_q.shape[1]]
    for layer in params["layers"]:
        tokens_q = cross_attn_block(tokens_q, tokens_kv, layer, params["num_heads"])
    x = tokens_q[:, 1:, :].transpose(0, 2, 1).reshape(B, C, H, W)
    return x


# ------------------------------------------------------------------
# Deterministic synthetic parameter init (shapes follow the module __init__).
# ------------------------------------------------------------------
def init_params(key, in_channels=3, embed_dim=32, patch_size=(2, 2),
                num_heads=4, num_layers=2):
    D = embed_dim
    keys = jax.random.split(key, 128)
    it = iter(keys)

    def nrm(shape, scale):
        return scale * jax.random.normal(next(it), shape, dtype=jnp.float32)

    conv_cfgs = [
        (in_channels, 64, (4, 4), 2, (1, 1), True),
        (64, 128, (4, 4), 2, (1, 1), True),
        (128, 128, (4, 4), 2, (1, 1), True),
        (128, 128, (4, 4), 2, (1, 1), True),
        (128, D, (4, 7), 2, (1, 3), False),
    ]
    conv_params = []
    for (cin, cout, (kh, kw), stride, (ph, pw), relu) in conv_cfgs:
        w = nrm((cout, cin, kh, kw), 1.0 / math.sqrt(cin * kh * kw))  # PyTorch OIHW
        b = nrm((cout,), 0.01)
        # OIHW -> (kh, kw, Cin, Cout) -> (kh*kw*Cin, Cout); matches im2col order.
        w_mat = jnp.transpose(w, (2, 3, 1, 0)).reshape(kh * kw * cin, cout)
        conv_params.append((w_mat, b, kh, kw, stride, ph, pw, relu))

    L = 1 + patch_size[0] * patch_size[1]
    cls_token = nrm((1, 1, D), 0.02)
    pos_embed = nrm((1, L, D), 0.02)

    ones_d = jnp.ones((D,), jnp.float32)
    zeros_d = jnp.zeros((D,), jnp.float32)

    def padv(v):
        return jnp.pad(v, (0, 4 * D - v.shape[0]))

    layers = []
    for _ in range(num_layers):
        in_w = nrm((3 * D, D), 1.0 / math.sqrt(D))     # MHA in_proj_weight
        in_b = nrm((3 * D,), 0.01)
        out_w = nrm((D, D), 1.0 / math.sqrt(D))
        out_b = nrm((D,), 0.01)
        fc1_w = nrm((4 * D, D), 1.0 / math.sqrt(D))
        fc1_b = nrm((4 * D,), 0.01)
        fc2_w = nrm((D, 4 * D), 1.0 / math.sqrt(4 * D))
        fc2_b = nrm((D,), 0.01)

        # Packed weights: [Wq^T | Wk^T | Wv^T | Wo^T | fc1^T]  -> (D, 8D)
        mats = jnp.concatenate(
            [in_w[:D].T, in_w[D:2 * D].T, in_w[2 * D:].T, out_w.T, fc1_w.T],
            axis=1)
        fc2_t = fc2_w.T                                # (4D, D)

        # Packed small vectors -> (12, 4D); row order must match _cross_attn_block_kernel.
        vec_rows = [None] * _N_VEC
        vec_rows[_LN1Q_W], vec_rows[_LN1Q_B] = padv(ones_d), padv(zeros_d)
        vec_rows[_LN1KV_W], vec_rows[_LN1KV_B] = padv(ones_d), padv(zeros_d)
        vec_rows[_BQ] = padv(in_b[:D])
        vec_rows[_BK] = padv(in_b[D:2 * D])
        vec_rows[_BV] = padv(in_b[2 * D:])
        vec_rows[_BO] = padv(out_b)
        vec_rows[_LN2_W], vec_rows[_LN2_B] = padv(ones_d), padv(zeros_d)
        vec_rows[_FC1_B] = fc1_b
        vec_rows[_FC2_B] = padv(fc2_b)
        vecs = jnp.stack(vec_rows, axis=0)             # (12, 4D)

        layers.append((mats, fc2_t, vecs))

    return dict(conv=conv_params, cls_token=cls_token, pos_embed=pos_embed,
                layers=layers, num_heads=num_heads)


if __name__ == "__main__":
    key = jax.random.PRNGKey(0)
    kp, k1, k2 = jax.random.split(key, 3)
    # Small config: embed_dim=32, patch_size=(2,2) -> 64x64 input gives a 2x2 feature map.
    params = init_params(kp, in_channels=3, embed_dim=32, patch_size=(2, 2),
                         num_heads=4, num_layers=2)
    frame_t = jax.random.normal(k1, (2, 3, 64, 64), dtype=jnp.float32)
    frame_tp1 = jax.random.normal(k2, (2, 3, 64, 64), dtype=jnp.float32)

    out = forward(frame_t, frame_tp1, params)
    jax.block_until_ready(out)
    assert out.shape == (2, 32, 2, 2), out.shape
    assert bool(jnp.all(jnp.isfinite(out)))
    print("KERNEL_OK")
</pallas_src>

<mosaic_0001>
module attributes {stable_mosaic.version = 11 : i64} {
  func.func @_matmul_bias_kernel(%arg0: i32, %arg1: memref<512x48xf32, #tpu.memory_space<vmem>>, %arg2: memref<48x64xf32, #tpu.memory_space<vmem>>, %arg3: memref<1x64xf32, #tpu.memory_space<vmem>>, %arg4: memref<512x64xf32, #tpu.memory_space<vmem>>) attributes {dimension_semantics = [#tpu.dimension_semantics<parallel>], iteration_bounds = array<i64: 4>, scalar_prefetch = 0 : i64, scratch_operands = 0 : i64, tpu.core_type = #tpu.core_type<tc>, window_params = [{transform_indices = @transform_0, window_bounds = array<i64: 512, 48>}, {pipeline_mode = #tpu.pipeline_mode<synchronous>, transform_indices = @transform_1, window_bounds = array<i64: 48, 64>}, {pipeline_mode = #tpu.pipeline_mode<synchronous>, transform_indices = @transform_2, window_bounds = array<i64: 1, 64>}, {transform_indices = @transform_3, window_bounds = array<i64: 512, 64>}]} {
    %c0 = arith.constant 0 : index
    %c0_0 = arith.constant 0 : index
    %0 = vector.load %arg1[%c0, %c0_0] : memref<512x48xf32, #tpu.memory_space<vmem>>, vector<512x48xf32>
    %c0_1 = arith.constant 0 : index
    %c0_2 = arith.constant 0 : index
    %1 = vector.load %arg2[%c0_1, %c0_2] : memref<48x64xf32, #tpu.memory_space<vmem>>, vector<48x64xf32>
    %cst = arith.constant dense<0.000000e+00> : vector<512x64xf32>
    %2 = tpu.matmul %0, %1, %cst {dimension_numbers = #tpu.dot_dimension_numbers<[1], [0], [0], [1], [0, 0, 1, 1], [], []>} : vector<512x48xf32>, vector<48x64xf32>, vector<512x64xf32> -> vector<512x64xf32>
    %c0_3 = arith.constant 0 : index
    %c0_4 = arith.constant 0 : index
    %3 = vector.load %arg3[%c0_3, %c0_4] : memref<1x64xf32, #tpu.memory_space<vmem>>, vector<1x64xf32>
    %4 = vector.broadcast %3 : vector<1x64xf32> to vector<512x64xf32>
    %5 = arith.addf %2, %4 : vector<512x64xf32>
    %cst_5 = arith.constant 0.000000e+00 : f32
    %6 = vector.broadcast %cst_5 : f32 to vector<512x64xf32>
    %7 = arith.maximumf %5, %6 : vector<512x64xf32>
    %c0_6 = arith.constant 0 : index
    %c0_7 = arith.constant 0 : index
    %8 = vector.load %arg4[%c0_6, %c0_7] : memref<512x64xf32, #tpu.memory_space<vmem>>, vector<512x64xf32>
    tpu.vector_store %arg4[%c0_6, %c0_7], %7 {strides = array<i32>} : memref<512x64xf32, #tpu.memory_space<vmem>>, vector<512x64xf32>,
    return
  }
  func.func @transform_0(%arg0: i32) -> (i32, i32) {
    %c0_i32 = arith.constant 0 : i32
    %c0_i32_0 = arith.constant 0 : i32
    return %arg0, %c0_i32 : i32, i32
  }
  func.func @transform_1(%arg0: i32) -> (i32, i32) {
    %c0_i32 = arith.constant 0 : i32
    %c0_i32_0 = arith.constant 0 : i32
    %c0_i32_1 = arith.constant 0 : i32
    return %c0_i32, %c0_i32_0 : i32, i32
  }
  func.func @transform_2(%arg0: i32) -> (i32, i32) {
    %c0_i32 = arith.constant 0 : i32
    %c0_i32_0 = arith.constant 0 : i32
    %c0_i32_1 = arith.constant 0 : i32
    return %c0_i32, %c0_i32_0 : i32, i32
  }
  func.func @transform_3(%arg0: i32) -> (i32, i32) {
    %c0_i32 = arith.constant 0 : i32
    %c0_i32_0 = arith.constant 0 : i32
    return %arg0, %c0_i32 : i32, i32
  }
}

</mosaic_0001>

<llo_original>
// kernel: tpu_custom_call.1
$region0: #{tpu_custom_call.1}
  #allocation0 [shape = 'u32[]', space=smem, size = 0x4, offset = 0x4, fixed_abs, tag = 'smem constant byte address 0x4 - core index']
  #allocation1 [shape = 'u32[72,128]{1,0:T(1,128)}', space=vmem, size = 0x9000, scoped, tag = 'internal scratch']
  %s0 = inlined_call_operand.vmem [shape: f32[2048,48], index: 0, kind: input, shape index: {}]
  %s1 = inlined_call_operand.vmem [shape: f32[48,64], index: 1, kind: input, shape index: {}]
  %s2 = inlined_call_operand.vmem [shape: f32[1,64], index: 2, kind: input, shape index: {}]
  %s3 = inlined_call_operand.vmem [shape: f32[2048,64], index: 3, kind: output, shape index: {}]
  %s4 = sld [smem:[#allocation0]]
  $region45: #{tpu_custom_call.1} parent=0
    _
  %s6 = ssub.s32 1, %s4
  %s7 = scalar_select 0, %s6, %s4
  loop: start=0, step=1, limit=6
  $region2: #{tpu_custom_call.1} parent=0 // loop_pre_header
    _
  $region3: #{tpu_custom_call.1} parent=0 // loop_header
    %s9 = sphi 0, %s13
    %p10 = scmp.ge.s32.totalorder %s9, 6
    %s19 = sphi 0, %s21
    %s22 = sphi 0, %s19
    %s23 = sphi 0, %s22
    %s39 = sphi 0, %s23
    %s43 = sphi 0, %s43
    %s45 = sphi 0, %s43
    %s46 = sphi 0, %s45
    %s60 = sphi 0, %s46
    %s64 = sphi 0, %s64
    %s66 = sphi 0, %s64
    %s67 = sphi 0, %s66
    %s81 = sphi 0, %s67
    %s87 = sphi 0, %s89
    %s90 = sphi 0, %s87
    %s91 = sphi 0, %s90
    %s107 = sphi 0, %s91
  $region4: #{tpu_custom_call.1} parent=0 // loop_header_branch
    %12 = sbr.rel (%p10) target = $region8
  $region5: #{tpu_custom_call.1} parent=0 // loop_body
    %s14 = ssub.s32 %s9, 1
    %s15 = ssub.s32 %s9, 2
    %s16 = sadd.s32 %s9, 1
    %s17 = ssub.s32 %s9, %s16
    %p18 = scmp.eq.s32.totalorder %s17, 0
    %s20 = sadd.s32 %s19, 1
    %s21 = scalar_select %p18, %s19, %s20
    %p24 = pneg %p18
    %p25 = scmp.eq.s32.totalorder %s9, 3
    %p26 = por %p24, %p25
    %p27 = scmp.ne.s32.totalorder %s19, %s22
    %p28 = scmp.eq.s32.totalorder %s9, 0
    %p29 = por %p27, %p28
    %p30 = scmp.ne.s32.totalorder %s19, %s22
    %p31 = scmp.eq.s32.totalorder %s14, 3
    %p32 = por %p30, %p31
    %p33 = scmp.ne.s32.totalorder %s22, %s23
    %p34 = scmp.eq.s32.totalorder %s14, 0
    %p35 = por %p33, %p34
    %p36 = scmp.ne.s32.totalorder %s22, %s23
    %p37 = scmp.eq.s32.totalorder %s15, 3
    %p38 = por %p36, %p37
    %p40 = scmp.ne.s32.totalorder %s23, %s39
    %p41 = scmp.eq.s32.totalorder %s15, 0
    %p42 = por %p40, %p41
    %s44 = sadd.s32 %s43, 1
    %p47 = scmp.eq.s32.totalorder %s9, 3
    %p48 = scmp.ne.s32.totalorder %s43, %s45
    %p49 = scmp.eq.s32.totalorder %s9, 0
    %p50 = por %p48, %p49
    %p51 = scmp.ne.s32.totalorder %s43, %s45
    %p52 = scmp.eq.s32.totalorder %s14, 3
    %p53 = por %p51, %p52
    %p54 = scmp.ne.s32.totalorder %s45, %s46
    %p55 = scmp.eq.s32.totalorder %s14, 0
    %p56 = por %p54, %p55
    %p57 = scmp.ne.s32.totalorder %s45, %s46
    %p58 = scmp.eq.s32.totalorder %s15, 3
    %p59 = por %p57, %p58
    %p61 = scmp.ne.s32.totalorder %s46, %s60
    %p62 = scmp.eq.s32.totalorder %s15, 0
    %p63 = por %p61, %p62
    %s65 = sadd.s32 %s64, 1
    %p68 = scmp.eq.s32.totalorder %s9, 3
    %p69 = scmp.ne.s32.totalorder %s64, %s66
    %p70 = scmp.eq.s32.totalorder %s9, 0
    %p71 = por %p69, %p70
    %p72 = scmp.ne.s32.totalorder %s64, %s66
    %p73 = scmp.eq.s32.totalorder %s14, 3
    %p74 = por %p72, %p73
    %p75 = scmp.ne.s32.totalorder %s66, %s67
    %p76 = scmp.eq.s32.totalorder %s14, 0
    %p77 = por %p75, %p76
    %p78 = scmp.ne.s32.totalorder %s66, %s67
    %p79 = scmp.eq.s32.totalorder %s15, 3
    %p80 = por %p78, %p79
    %p82 = scmp.ne.s32.totalorder %s67, %s81
    %p83 = scmp.eq.s32.totalorder %s15, 0
    %p84 = por %p82, %p83
    %s85 = ssub.s32 %s9, %s16
    %p86 = scmp.eq.s32.totalorder %s85, 0
    %s88 = sadd.s32 %s87, 1
    %s89 = scalar_select %p86, %s87, %s88
    %p92 = pneg %p86
    %p93 = scmp.eq.s32.totalorder %s9, 3
    %p94 = por %p92, %p93
    %p95 = scmp.ne.s32.totalorder %s87, %s90
    %p96 = scmp.eq.s32.totalorder %s9, 0
    %p97 = por %p95, %p96
    %p98 = scmp.ne.s32.totalorder %s87, %s90
    %p99 = scmp.eq.s32.totalorder %s14, 3
    %p100 = por %p98, %p99
    %p101 = scmp.ne.s32.totalorder %s90, %s91
    %p102 = scmp.eq.s32.totalorder %s14, 0
    %p103 = por %p101, %p102
    %p104 = scmp.ne.s32.totalorder %s90, %s91
    %p105 = scmp.eq.s32.totalorder %s15, 3
    %p106 = por %p104, %p105
    %p108 = scmp.ne.s32.totalorder %s91, %s107
    %p109 = scmp.eq.s32.totalorder %s15, 0
    %p110 = por %p108, %p109
    %p111 = scmp.le.s32.totalorder 1, %s9
    %p112 = scmp.lt.s32.totalorder %s9, 5
    %p113 = pnand %p111, %p112
    %p114 = pneg %p113
    // Predicated region
    $region9: #{tpu_custom_call.1} parent=5 // pred_check
      _
    $region10: #{tpu_custom_call.1} parent=5 // pred_check_branch
      %116 = sbr.rel (%p113) target = $region12
    $region11: #{tpu_custom_call.1} parent=5 // pred_region
      %s117 = ssub.s32 %s9, 1
      // Predicated region
      $region13: #{tpu_custom_call.1} parent=11 // pred_check
        %p118 = pneg %p56
      $region14: #{tpu_custom_call.1} parent=11 // pred_check_branch
        %120 = sbr.rel (%p118) target = $region16
      $region15: #{tpu_custom_call.1} parent=11 // pred_region
        _
      $region16: #{tpu_custom_call.1} parent=11 // pred_fallthru
        _
      // Predicated region
      $region17: #{tpu_custom_call.1} parent=11 // pred_check
        %p121 = pneg %p77
      $region18: #{tpu_custom_call.1} parent=11 // pred_check_branch
        %123 = sbr.rel (%p121) target = $region20
      $region19: #{tpu_custom_call.1} parent=11 // pred_region
        _
      $region20: #{tpu_custom_call.1} parent=11 // pred_fallthru
        _
    $region12: #{tpu_custom_call.1} parent=5 // pred_fallthru
      _
    %p124 = scmp.lt.s32.totalorder %s9, 4
    // Predicated region
    $region21: #{tpu_custom_call.1} parent=5 // pred_check
      %p125 = pneg %p124
    $region22: #{tpu_custom_call.1} parent=5 // pred_check_branch
      %127 = sbr.rel (%p125) target = $region24
    $region23: #{tpu_custom_call.1} parent=5 // pred_region
      // Predicated region
      $region25: #{tpu_custom_call.1} parent=23 // pred_check
        %p128 = pneg %p29
      $region26: #{tpu_custom_call.1} parent=23 // pred_check_branch
        %130 = sbr.rel (%p128) target = $region28
      $region27: #{tpu_custom_call.1} parent=23 // pred_region
        %s131 = smul.u32 64, %s9
        %p132 = scmp.lt.s32.totalorder %s131, 255
        %s133 = scalar_select %p132, %s131, 255
        %s134 = smul.addr %s133, 8
        %s135 = scalar_lea.vmem %s0, %s134
        %s136 = smul.u32 64, %s9
      $region28: #{tpu_custom_call.1} parent=23 // pred_fallthru
        _
    $region24: #{tpu_custom_call.1} parent=5 // pred_fallthru
      _
    %p137 = scmp.le.s32.totalorder 1, %s9
    %p138 = scmp.lt.s32.totalorder %s9, 5
    %p139 = pnand %p137, %p138
    %p140 = pneg %p139
    // Predicated region
    $region29: #{tpu_custom_call.1} parent=5 // pred_check
      _
    $region30: #{tpu_custom_call.1} parent=5 // pred_check_branch
      %142 = sbr.rel (%p139) target = $region32
    $region31: #{tpu_custom_call.1} parent=5 // pred_region
      %s143 = ssub.s32 %s9, 1
      %s144 = smul.u32 64, %s14
      %p145 = scmp.lt.s32.totalorder %s144, 255
      %s146 = scalar_select %p145, %s144, 255
      %s147 = smul.addr %s146, 8
      %s148 = scalar_lea.vmem %s0, %s147
      %p149 = pneg %p35
      %p150 = pneg %p32
      %p151 = pneg %p56
      %p152 = pneg %p53
      %p153 = pneg %p77
      %p154 = pneg %p74
      %p155 = pneg %p103
      %p156 = pneg %p100
      %s157 = smul.u32 64, %s14
      %p158 = scmp.lt.s32.totalorder %s157, 255
      %s159 = scalar_select %p158, %s157, 255
      %s160 = smul.addr %s159, 8
      %s161 = scalar_lea.vmem %s3, %s160
      %s162 = smul.u32 64, %s14
      %p163 = scmp.lt.s32.totalorder %s162, 255
      %s164 = scalar_select %p163, %s162, 255
      %s165 = smul.addr %s164, 8
      %s166 = scalar_lea.vmem %s0, %s165
      %s167 = smul.u32 64, %s14
      %s168 = smul.u32 64, %s14
      %p169 = scmp.lt.s32.totalorder %s168, 255
      %s170 = scalar_select %p169, %s168, 255
      %s171 = smul.addr %s170, 8
      %s172 = scalar_lea.vmem %s3, %s171
      %s173 = smul.u32 64, %s14
      %v174 = vld [vmem:[%s166] sm:$0xff]
      %v175 = vld [vmem:[%s166 + $0x8] sm:$0xff]
      %v176 = vld [vmem:[%s166 + $0x10] sm:$0xff]
      %v177 = vld [vmem:[%s166 + $0x18] sm:$0xff]
      %v178 = vld [vmem:[%s166 + $0x20] sm:$0xff]
      %v179 = vld [vmem:[%s166 + $0x28] sm:$0xff]
      %v180 = vld [vmem:[%s166 + $0x30] sm:$0xff]
      %v181 = vld [vmem:[%s166 + $0x38] sm:$0xff]
      %v182 = vld [vmem:[%s166 + $0x40] sm:$0xff]
      %v183 = vld [vmem:[%s166 + $0x48] sm:$0xff]
      %v184 = vld [vmem:[%s166 + $0x50] sm:$0xff]
      %v185 = vld [vmem:[%s166 + $0x58] sm:$0xff]
      %v186 = vld [vmem:[%s166 + $0x60] sm:$0xff]
      %v187 = vld [vmem:[%s166 + $0x68] sm:$0xff]
      %v188 = vld [vmem:[%s166 + $0x70] sm:$0xff]
      %v189 = vld [vmem:[%s166 + $0x78] sm:$0xff]
      %v190 = vld [vmem:[%s166 + $0x80] sm:$0xff]
      %v191 = vld [vmem:[%s166 + $0x88] sm:$0xff]
      %v192 = vld [vmem:[%s166 + $0x90] sm:$0xff]
      %v193 = vld [vmem:[%s166 + $0x98] sm:$0xff]
      %v194 = vld [vmem:[%s166 + $0xa0] sm:$0xff]
      %v195 = vld [vmem:[%s166 + $0xa8] sm:$0xff]
      %v196 = vld [vmem:[%s166 + $0xb0] sm:$0xff]
      %v197 = vld [vmem:[%s166 + $0xb8] sm:$0xff]
      %v198 = vld [vmem:[%s166 + $0xc0] sm:$0xff]
      %v199 = vld [vmem:[%s166 + $0xc8] sm:$0xff]
      %v200 = vld [vmem:[%s166 + $0xd0] sm:$0xff]
      %v201 = vld [vmem:[%s166 + $0xd8] sm:$0xff]
      %v202 = vld [vmem:[%s166 + $0xe0] sm:$0xff]
      %v203 = vld [vmem:[%s166 + $0xe8] sm:$0xff]
      %v204 = vld [vmem:[%s166 + $0xf0] sm:$0xff]
      %v205 = vld [vmem:[%s166 + $0xf8] sm:$0xff]
      %v206 = vld [vmem:[%s166 + $0x100] sm:$0xff]
      %v207 = vld [vmem:[%s166 + $0x108] sm:$0xff]
      %v208 = vld [vmem:[%s166 + $0x110] sm:$0xff]
      %v209 = vld [vmem:[%s166 + $0x118] sm:$0xff]
      %v210 = vld [vmem:[%s166 + $0x120] sm:$0xff]
      %v211 = vld [vmem:[%s166 + $0x128] sm:$0xff]
      %v212 = vld [vmem:[%s166 + $0x130] sm:$0xff]
      %v213 = vld [vmem:[%s166 + $0x138] sm:$0xff]
      %v214 = vld [vmem:[%s166 + $0x140] sm:$0xff]
      %v215 = vld [vmem:[%s166 + $0x148] sm:$0xff]
      %v216 = vld [vmem:[%s166 + $0x150] sm:$0xff]
      %v217 = vld [vmem:[%s166 + $0x158] sm:$0xff]
      %v218 = vld [vmem:[%s166 + $0x160] sm:$0xff]
      %v219 = vld [vmem:[%s166 + $0x168] sm:$0xff]
      %v220 = vld [vmem:[%s166 + $0x170] sm:$0xff]
      %v221 = vld [vmem:[%s166 + $0x178] sm:$0xff]
      %v222 = vld [vmem:[%s166 + $0x180] sm:$0xff]
      %v223 = vld [vmem:[%s166 + $0x188] sm:$0xff]
      %v224 = vld [vmem:[%s166 + $0x190] sm:$0xff]
      %v225 = vld [vmem:[%s166 + $0x198] sm:$0xff]
      %v226 = vld [vmem:[%s166 + $0x1a0] sm:$0xff]
      %v227 = vld [vmem:[%s166 + $0x1a8] sm:$0xff]
      %v228 = vld [vmem:[%s166 + $0x1b0] sm:$0xff]
      %v229 = vld [vmem:[%s166 + $0x1b8] sm:$0xff]
      %v230 = vld [vmem:[%s166 + $0x1c0] sm:$0xff]
      %v231 = vld [vmem:[%s166 + $0x1c8] sm:$0xff]
      %v232 = vld [vmem:[%s166 + $0x1d0] sm:$0xff]
      %v233 = vld [vmem:[%s166 + $0x1d8] sm:$0xff]
      %v234 = vld [vmem:[%s166 + $0x1e0] sm:$0xff]
      %v235 = vld [vmem:[%s166 + $0x1e8] sm:$0xff]
      %v236 = vld [vmem:[%s166 + $0x1f0] sm:$0xff]
      %v237 = vld [vmem:[%s166 + $0x1f8] sm:$0xff]
      %v238 = vld [vmem:[%s1] sm:$0xff]
      %v239 = vld [vmem:[%s1 + $0x8] sm:$0xff]
      %v240 = vld [vmem:[%s1 + $0x10] sm:$0xff]
      %v241 = vld [vmem:[%s1 + $0x18] sm:$0xff]
      %v242 = vld [vmem:[%s1 + $0x20] sm:$0xff]
      %v243 = vld [vmem:[%s1 + $0x28] sm:$0xff]
      %v244 = vld [vmem:[%s2] sm:$0x1]
      %v246 = vperm.slane %v244, 0
      %vm248 = vcmask 392192
      %v250 = vsel %vm248, %v174, 0
      %v253 = vsel %vm248, %v175, 0
      %v256 = vsel %vm248, %v176, 0
      %v259 = vsel %vm248, %v177, 0
      %v262 = vsel %vm248, %v178, 0
      %v265 = vsel %vm248, %v179, 0
      %v268 = vsel %vm248, %v180, 0
      %v271 = vsel %vm248, %v181, 0
      %v274 = vsel %vm248, %v182, 0
      %v277 = vsel %vm248, %v183, 0
      %v280 = vsel %vm248, %v184, 0
      %v283 = vsel %vm248, %v185, 0
      %v286 = vsel %vm248, %v186, 0
      %v289 = vsel %vm248, %v187, 0
      %v292 = vsel %vm248, %v188, 0
      %v295 = vsel %vm248, %v189, 0
      %v298 = vsel %vm248, %v190, 0
      %v301 = vsel %vm248, %v191, 0
      %v304 = vsel %vm248, %v192, 0
      %v307 = vsel %vm248, %v193, 0
      %v310 = vsel %vm248, %v194, 0
      %v313 = vsel %vm248, %v195, 0
      %v316 = vsel %vm248, %v196, 0
      %v319 = vsel %vm248, %v197, 0
      %v322 = vsel %vm248, %v198, 0
      %v325 = vsel %vm248, %v199, 0
      %v328 = vsel %vm248, %v200, 0
      %v331 = vsel %vm248, %v201, 0
      %v334 = vsel %vm248, %v202, 0
      %v337 = vsel %vm248, %v203, 0
      %v340 = vsel %vm248, %v204, 0
      %v343 = vsel %vm248, %v205, 0
      %v346 = vsel %vm248, %v206, 0
      %v349 = vsel %vm248, %v207, 0
      %v352 = vsel %vm248, %v208, 0
      %v355 = vsel %vm248, %v209, 0
      %v358 = vsel %vm248, %v210, 0
      %v361 = vsel %vm248, %v211, 0
      %v364 = vsel %vm248, %v212, 0
      %v367 = vsel %vm248, %v213, 0
      %v370 = vsel %vm248, %v214, 0
      %v373 = vsel %vm248, %v215, 0
      %v376 = vsel %vm248, %v216, 0
      %v379 = vsel %vm248, %v217, 0
      %v382 = vsel %vm248, %v218, 0
      %v385 = vsel %vm248, %v219, 0
      %v388 = vsel %vm248, %v220, 0
      %v391 = vsel %vm248, %v221, 0
      %v394 = vsel %vm248, %v222, 0
      %v397 = vsel %vm248, %v223, 0
      %v400 = vsel %vm248, %v224, 0
      %v403 = vsel %vm248, %v225, 0
      %v406 = vsel %vm248, %v226, 0
      %v409 = vsel %vm248, %v227, 0
      %v412 = vsel %vm248, %v228, 0
      %v415 = vsel %vm248, %v229, 0
      %v418 = vsel %vm248, %v230, 0
      %v421 = vsel %vm248, %v231, 0
      %v424 = vsel %vm248, %v232, 0
      %v427 = vsel %vm248, %v233, 0
      %v430 = vsel %vm248, %v234, 0
      %v433 = vsel %vm248, %v235, 0
      %v436 = vsel %vm248, %v236, 0
      %v439 = vsel %vm248, %v237, 0
      %441 = vmatpush.msra.mxu0 0.0
      %442 = vmatpush.msra.mxu0 0.0
      %443 = vmatpush.msra.mxu0 0.0
      %444 = vmatpush.msra.mxu0 0.0
      %445 = vmatpush.msra.mxu0 0.0
      %446 = vmatpush.msra.mxu0 0.0
      %447 = vmatpush.msra.mxu0 0.0
      %448 = vmatpush.msra.mxu0 0.0
      %449 = vmatpush.msra.mxu0 0.0
      %450 = vmatpush.msra.mxu0 0.0
      %451 = vmatpush.msra.mxu0 %v243
      %452 = vmatpush.msra.mxu0 %v242
      %453 = vmatpush.msra.mxu0 %v241
      %454 = vmatpush.msra.mxu0 %v240
      %455 = vmatpush.msra.mxu0 %v239
      %456 = vmatpush.msra.mxu0 %v238
      %457 = vmatmul.f32.gmra.mxu0 %v250
      %v458 = vpop.f32.mrf.mxu0
      %v459 = vadd.f32 %v246, %v458
      %460 = vmatmul.f32.gmra.mxu0 %v253
      %v461 = vpop.f32.mrf.mxu0
      %v462 = vadd.f32 %v246, %v461
      %463 = vmatmul.f32.gmra.mxu0 %v256
      %v464 = vpop.f32.mrf.mxu0
      %v465 = vadd.f32 %v246, %v464
      %466 = vmatmul.f32.gmra.mxu0 %v259
      %v467 = vpop.f32.mrf.mxu0
      %v468 = vadd.f32 %v246, %v467
      %469 = vmatmul.f32.gmra.mxu0 %v262
      %v470 = vpop.f32.mrf.mxu0
      %v471 = vadd.f32 %v246, %v470
      %472 = vmatmul.f32.gmra.mxu0 %v265
      %v473 = vpop.f32.mrf.mxu0
      %v474 = vadd.f32 %v246, %v473
      %475 = vmatmul.f32.gmra.mxu0 %v268
      %v476 = vpop.f32.mrf.mxu0
      %v477 = vadd.f32 %v246, %v476
      %478 = vmatmul.f32.gmra.mxu0 %v271
      %v479 = vpop.f32.mrf.mxu0
      %v480 = vadd.f32 %v246, %v479
      %481 = vmatmul.f32.gmra.mxu0 %v274
      %v482 = vpop.f32.mrf.mxu0
      %v483 = vadd.f32 %v246, %v482
      %484 = vmatmul.f32.gmra.mxu0 %v277
      %v485 = vpop.f32.mrf.mxu0
      %v486 = vadd.f32 %v246, %v485
      %487 = vmatmul.f32.gmra.mxu0 %v280
      %v488 = vpop.f32.mrf.mxu0
      %v489 = vadd.f32 %v246, %v488
      %490 = vmatmul.f32.gmra.mxu0 %v283
      %v491 = vpop.f32.mrf.mxu0
      %v492 = vadd.f32 %v246, %v491
      %493 = vmatmul.f32.gmra.mxu0 %v286
      %v494 = vpop.f32.mrf.mxu0
      %v495 = vadd.f32 %v246, %v494
      %496 = vmatmul.f32.gmra.mxu0 %v289
      %v497 = vpop.f32.mrf.mxu0
      %v498 = vadd.f32 %v246, %v497
      %499 = vmatmul.f32.gmra.mxu0 %v292
      %v500 = vpop.f32.mrf.mxu0
      %v501 = vadd.f32 %v246, %v500
      %502 = vmatmul.f32.gmra.mxu0 %v295
      %v503 = vpop.f32.mrf.mxu0
      %v504 = vadd.f32 %v246, %v503
      %505 = vmatmul.f32.gmra.mxu0 %v298
      %v506 = vpop.f32.mrf.mxu0
      %v507 = vadd.f32 %v246, %v506
      %508 = vmatmul.f32.gmra.mxu0 %v301
      %v509 = vpop.f32.mrf.mxu0
      %v510 = vadd.f32 %v246, %v509
      %511 = vmatmul.f32.gmra.mxu0 %v304
      %v512 = vpop.f32.mrf.mxu0
      %v513 = vadd.f32 %v246, %v512
      %514 = vmatmul.f32.gmra.mxu0 %v307
      %v515 = vpop.f32.mrf.mxu0
      %v516 = vadd.f32 %v246, %v515
      %517 = vmatmul.f32.gmra.mxu0 %v310
      %v518 = vpop.f32.mrf.mxu0
      %v519 = vadd.f32 %v246, %v518
      %520 = vmatmul.f32.gmra.mxu0 %v313
      %v521 = vpop.f32.mrf.mxu0
      %v522 = vadd.f32 %v246, %v521
      %523 = vmatmul.f32.gmra.mxu0 %v316
      %v524 = vpop.f32.mrf.mxu0
      %v525 = vadd.f32 %v246, %v524
      %526 = vmatmul.f32.gmra.mxu0 %v319
      %v527 = vpop.f32.mrf.mxu0
      %v528 = vadd.f32 %v246, %v527
      %529 = vmatmul.f32.gmra.mxu0 %v322
      %v530 = vpop.f32.mrf.mxu0
      %v531 = vadd.f32 %v246, %v530
      %532 = vmatmul.f32.gmra.mxu0 %v325
      %v533 = vpop.f32.mrf.mxu0
      %v534 = vadd.f32 %v246, %v533
      %535 = vmatmul.f32.gmra.mxu0 %v328
      %v536 = vpop.f32.mrf.mxu0
      %v537 = vadd.f32 %v246, %v536
      %538 = vmatmul.f32.gmra.mxu0 %v331
      %v539 = vpop.f32.mrf.mxu0
      %v540 = vadd.f32 %v246, %v539
      %541 = vmatmul.f32.gmra.mxu0 %v334
      %v542 = vpop.f32.mrf.mxu0
      %v543 = vadd.f32 %v246, %v542
      %544 = vmatmul.f32.gmra.mxu0 %v337
      %v545 = vpop.f32.mrf.mxu0
      %v546 = vadd.f32 %v246, %v545
      %547 = vmatmul.f32.gmra.mxu0 %v340
      %v548 = vpop.f32.mrf.mxu0
      %v549 = vadd.f32 %v246, %v548
      %550 = vmatmul.f32.gmra.mxu0 %v343
      %v551 = vpop.f32.mrf.mxu0
      %v552 = vadd.f32 %v246, %v551
      %553 = vmatmul.f32.gmra.mxu0 %v346
      %v554 = vpop.f32.mrf.mxu0
      %v555 = vadd.f32 %v246, %v554
      %556 = vmatmul.f32.gmra.mxu0 %v349
      %v557 = vpop.f32.mrf.mxu0
      %v558 = vadd.f32 %v246, %v557
      %559 = vmatmul.f32.gmra.mxu0 %v352
      %v560 = vpop.f32.mrf.mxu0
      %v561 = vadd.f32 %v246, %v560
      %562 = vmatmul.f32.gmra.mxu0 %v355
      %v563 = vpop.f32.mrf.mxu0
      %v564 = vadd.f32 %v246, %v563
      %565 = vmatmul.f32.gmra.mxu0 %v358
      %v566 = vpop.f32.mrf.mxu0
      %v567 = vadd.f32 %v246, %v566
      %568 = vmatmul.f32.gmra.mxu0 %v361
      %v569 = vpop.f32.mrf.mxu0
      %v570 = vadd.f32 %v246, %v569
      %571 = vmatmul.f32.gmra.mxu0 %v364
      %v572 = vpop.f32.mrf.mxu0
      %v573 = vadd.f32 %v246, %v572
      %574 = vmatmul.f32.gmra.mxu0 %v367
      %v575 = vpop.f32.mrf.mxu0
      %v576 = vadd.f32 %v246, %v575
      %577 = vmatmul.f32.gmra.mxu0 %v370
      %v578 = vpop.f32.mrf.mxu0
      %v579 = vadd.f32 %v246, %v578
      %580 = vmatmul.f32.gmra.mxu0 %v373
      %v581 = vpop.f32.mrf.mxu0
      %v582 = vadd.f32 %v246, %v581
      %583 = vmatmul.f32.gmra.mxu0 %v376
      %v584 = vpop.f32.mrf.mxu0
      %v585 = vadd.f32 %v246, %v584
      %586 = vmatmul.f32.gmra.mxu0 %v379
      %v587 = vpop.f32.mrf.mxu0
      %v588 = vadd.f32 %v246, %v587
      %589 = vmatmul.f32.gmra.mxu0 %v382
      %v590 = vpop.f32.mrf.mxu0
      %v591 = vadd.f32 %v246, %v590
      %592 = vmatmul.f32.gmra.mxu0 %v385
      %v593 = vpop.f32.mrf.mxu0
      %v594 = vadd.f32 %v246, %v593
      %595 = vmatmul.f32.gmra.mxu0 %v388
      %v596 = vpop.f32.mrf.mxu0
      %v597 = vadd.f32 %v246, %v596
      %598 = vmatmul.f32.gmra.mxu0 %v391
      %v599 = vpop.f32.mrf.mxu0
      %v600 = vadd.f32 %v246, %v599
      %601 = vmatmul.f32.gmra.mxu0 %v394
      %v602 = vpop.f32.mrf.mxu0
      %v603 = vadd.f32 %v246, %v602
      %604 = vmatmul.f32.gmra.mxu0 %v397
      %v605 = vpop.f32.mrf.mxu0
      %v606 = vadd.f32 %v246, %v605
      %607 = vmatmul.f32.gmra.mxu0 %v400
      %v608 = vpop.f32.mrf.mxu0
      %v609 = vadd.f32 %v246, %v608
      %610 = vmatmul.f32.gmra.mxu0 %v403
      %v611 = vpop.f32.mrf.mxu0
      %v612 = vadd.f32 %v246, %v611
      %613 = vmatmul.f32.gmra.mxu0 %v406
      %v614 = vpop.f32.mrf.mxu0
      %v615 = vadd.f32 %v246, %v614
      %616 = vmatmul.f32.gmra.mxu0 %v409
      %v617 = vpop.f32.mrf.mxu0
      %v618 = vadd.f32 %v246, %v617
      %619 = vmatmul.f32.gmra.mxu0 %v412
      %v620 = vpop.f32.mrf.mxu0
      %v621 = vadd.f32 %v246, %v620
      %622 = vmatmul.f32.gmra.mxu0 %v415
      %v623 = vpop.f32.mrf.mxu0
      %v624 = vadd.f32 %v246, %v623
      %625 = vmatmul.f32.gmra.mxu0 %v418
      %v626 = vpop.f32.mrf.mxu0
      %v627 = vadd.f32 %v246, %v626
      %628 = vmatmul.f32.gmra.mxu0 %v421
      %v629 = vpop.f32.mrf.mxu0
      %v630 = vadd.f32 %v246, %v629
      %631 = vmatmul.f32.gmra.mxu0 %v424
      %v632 = vpop.f32.mrf.mxu0
      %v633 = vadd.f32 %v246, %v632
      %634 = vmatmul.f32.gmra.mxu0 %v427
      %v635 = vpop.f32.mrf.mxu0
      %v636 = vadd.f32 %v246, %v635
      %637 = vmatmul.f32.gmra.mxu0 %v430
      %v638 = vpop.f32.mrf.mxu0
      %v639 = vadd.f32 %v246, %v638
      %640 = vmatmul.f32.gmra.mxu0 %v433
      %v641 = vpop.f32.mrf.mxu0
      %v642 = vadd.f32 %v246, %v641
      %643 = vmatmul.f32.gmra.mxu0 %v436
      %v644 = vpop.f32.mrf.mxu0
      %v645 = vadd.f32 %v246, %v644
      %646 = vmatmul.f32.gmra.mxu0 %v439
      %v647 = vpop.f32.mrf.mxu0
      %v648 = vadd.f32 %v246, %v647
      %649 = vdwg.mxu0
      %v650 = vmax.f32 %v459, 0.0
      %v651 = vmax.f32 %v462, 0.0
      %v652 = vmax.f32 %v465, 0.0
      %v653 = vmax.f32 %v468, 0.0
      %v654 = vmax.f32 %v471, 0.0
      %v655 = vmax.f32 %v474, 0.0
      %v656 = vmax.f32 %v477, 0.0
      %v657 = vmax.f32 %v480, 0.0
      %v658 = vmax.f32 %v483, 0.0
      %v659 = vmax.f32 %v486, 0.0
      %v660 = vmax.f32 %v489, 0.0
      %v661 = vmax.f32 %v492, 0.0
      %v662 = vmax.f32 %v495, 0.0
      %v663 = vmax.f32 %v498, 0.0
      %v664 = vmax.f32 %v501, 0.0
      %v665 = vmax.f32 %v504, 0.0
      %v666 = vmax.f32 %v507, 0.0
      %v667 = vmax.f32 %v510, 0.0
      %v668 = vmax.f32 %v513, 0.0
      %v669 = vmax.f32 %v516, 0.0
      %v670 = vmax.f32 %v519, 0.0
      %v671 = vmax.f32 %v522, 0.0
      %v672 = vmax.f32 %v525, 0.0
      %v673 = vmax.f32 %v528, 0.0
      %v674 = vmax.f32 %v531, 0.0
      %v675 = vmax.f32 %v534, 0.0
      %v676 = vmax.f32 %v537, 0.0
      %v677 = vmax.f32 %v540, 0.0
      %v678 = vmax.f32 %v543, 0.0
      %v679 = vmax.f32 %v546, 0.0
      %v680 = vmax.f32 %v549, 0.0
      %v681 = vmax.f32 %v552, 0.0
      %v682 = vmax.f32 %v555, 0.0
      %v683 = vmax.f32 %v558, 0.0
      %v684 = vmax.f32 %v561, 0.0
      %v685 = vmax.f32 %v564, 0.0
      %v686 = vmax.f32 %v567, 0.0
      %v687 = vmax.f32 %v570, 0.0
      %v688 = vmax.f32 %v573, 0.0
      %v689 = vmax.f32 %v576, 0.0
      %v690 = vmax.f32 %v579, 0.0
      %v691 = vmax.f32 %v582, 0.0
      %v692 = vmax.f32 %v585, 0.0
      %v693 = vmax.f32 %v588, 0.0
      %v694 = vmax.f32 %v591, 0.0
      %v695 = vmax.f32 %v594, 0.0
      %v696 = vmax.f32 %v597, 0.0
      %v697 = vmax.f32 %v600, 0.0
      %v698 = vmax.f32 %v603, 0.0
      %v699 = vmax.f32 %v606, 0.0
      %v700 = vmax.f32 %v609, 0.0
      %v701 = vmax.f32 %v612, 0.0
      %v702 = vmax.f32 %v615, 0.0
      %v703 = vmax.f32 %v618, 0.0
      %v704 = vmax.f32 %v621, 0.0
      %v705 = vmax.f32 %v624, 0.0
      %v706 = vmax.f32 %v627, 0.0
      %v707 = vmax.f32 %v630, 0.0
      %v708 = vmax.f32 %v633, 0.0
      %v709 = vmax.f32 %v636, 0.0
      %v710 = vmax.f32 %v639, 0.0
      %v711 = vmax.f32 %v642, 0.0
      %v712 = vmax.f32 %v645, 0.0
      %v713 = vmax.f32 %v648, 0.0
      %vm714 = vcmask 523264
      %715 = vst.msk [vmem:[%s172] sm:$0xff] %vm714, %v650
      %716 = vst.msk [vmem:[%s172 + $0x8] sm:$0xff] %vm714, %v651
      %717 = vst.msk [vmem:[%s172 + $0x10] sm:$0xff] %vm714, %v652
      %718 = vst.msk [vmem:[%s172 + $0x18] sm:$0xff] %vm714, %v653
      %719 = vst.msk [vmem:[%s172 + $0x20] sm:$0xff] %vm714, %v654
      %720 = vst.msk [vmem:[%s172 + $0x28] sm:$0xff] %vm714, %v655
      %721 = vst.msk [vmem:[%s172 + $0x30] sm:$0xff] %vm714, %v656
      %722 = vst.msk [vmem:[%s172 + $0x38] sm:$0xff] %vm714, %v657
      %723 = vst.msk [vmem:[%s172 + $0x40] sm:$0xff] %vm714, %v658
      %724 = vst.msk [vmem:[%s172 + $0x48] sm:$0xff] %vm714, %v659
      %725 = vst.msk [vmem:[%s172 + $0x50] sm:$0xff] %vm714, %v660
      %726 = vst.msk [vmem:[%s172 + $0x58] sm:$0xff] %vm714, %v661
      %727 = vst.msk [vmem:[%s172 + $0x60] sm:$0xff] %vm714, %v662
      %728 = vst.msk [vmem:[%s172 + $0x68] sm:$0xff] %vm714, %v663
      %729 = vst.msk [vmem:[%s172 + $0x70] sm:$0xff] %vm714, %v664
      %730 = vst.msk [vmem:[%s172 + $0x78] sm:$0xff] %vm714, %v665
      %731 = vst.msk [vmem:[%s172 + $0x80] sm:$0xff] %vm714, %v666
      %732 = vst.msk [vmem:[%s172 + $0x88] sm:$0xff] %vm714, %v667
      %733 = vst.msk [vmem:[%s172 + $0x90] sm:$0xff] %vm714, %v668
      %734 = vst.msk [vmem:[%s172 + $0x98] sm:$0xff] %vm714, %v669
      %735 = vst.msk [vmem:[%s172 + $0xa0] sm:$0xff] %vm714, %v670
      %736 = vst.msk [vmem:[%s172 + $0xa8] sm:$0xff] %vm714, %v671
      %737 = vst.msk [vmem:[%s172 + $0xb0] sm:$0xff] %vm714, %v672
      %738 = vst.msk [vmem:[%s172 + $0xb8] sm:$0xff] %vm714, %v673
      %739 = vst.msk [vmem:[%s172 + $0xc0] sm:$0xff] %vm714, %v674
      %740 = vst.msk [vmem:[%s172 + $0xc8] sm:$0xff] %vm714, %v675
      %741 = vst.msk [vmem:[%s172 + $0xd0] sm:$0xff] %vm714, %v676
      %742 = vst.msk [vmem:[%s172 + $0xd8] sm:$0xff] %vm714, %v677
      %743 = vst.msk [vmem:[%s172 + $0xe0] sm:$0xff] %vm714, %v678
      %744 = vst.msk [vmem:[%s172 + $0xe8] sm:$0xff] %vm714, %v679
      %745 = vst.msk [vmem:[%s172 + $0xf0] sm:$0xff] %vm714, %v680
      %746 = vst.msk [vmem:[%s172 + $0xf8] sm:$0xff] %vm714, %v681
      %747 = vst.msk [vmem:[%s172 + $0x100] sm:$0xff] %vm714, %v682
      %748 = vst.msk [vmem:[%s172 + $0x108] sm:$0xff] %vm714, %v683
      %749 = vst.msk [vmem:[%s172 + $0x110] sm:$0xff] %vm714, %v684
      %750 = vst.msk [vmem:[%s172 + $0x118] sm:$0xff] %vm714, %v685
      %751 = vst.msk [vmem:[%s172 + $0x120] sm:$0xff] %vm714, %v686
      %752 = vst.msk [vmem:[%s172 + $0x128] sm:$0xff] %vm714, %v687
      %753 = vst.msk [vmem:[%s172 + $0x130] sm:$0xff] %vm714, %v688
      %754 = vst.msk [vmem:[%s172 + $0x138] sm:$0xff] %vm714, %v689
      %755 = vst.msk [vmem:[%s172 + $0x140] sm:$0xff] %vm714, %v690
      %756 = vst.msk [vmem:[%s172 + $0x148] sm:$0xff] %vm714, %v691
      %757 = vst.msk [vmem:[%s172 + $0x150] sm:$0xff] %vm714, %v692
      %758 = vst.msk [vmem:[%s172 + $0x158] sm:$0xff] %vm714, %v693
      %759 = vst.msk [vmem:[%s172 + $0x160] sm:$0xff] %vm714, %v694
      %760 = vst.msk [vmem:[%s172 + $0x168] sm:$0xff] %vm714, %v695
      %761 = vst.msk [vmem:[%s172 + $0x170] sm:$0xff] %vm714, %v696
      %762 = vst.msk [vmem:[%s172 + $0x178] sm:$0xff] %vm714, %v697
      %763 = vst.msk [vmem:[%s172 + $0x180] sm:$0xff] %vm714, %v698
      %764 = vst.msk [vmem:[%s172 + $0x188] sm:$0xff] %vm714, %v699
      %765 = vst.msk [vmem:[%s172 + $0x190] sm:$0xff] %vm714, %v700
      %766 = vst.msk [vmem:[%s172 + $0x198] sm:$0xff] %vm714, %v701
      %767 = vst.msk [vmem:[%s172 + $0x1a0] sm:$0xff] %vm714, %v702
      %768 = vst.msk [vmem:[%s172 + $0x1a8] sm:$0xff] %vm714, %v703
      %769 = vst.msk [vmem:[%s172 + $0x1b0] sm:$0xff] %vm714, %v704
      %770 = vst.msk [vmem:[%s172 + $0x1b8] sm:$0xff] %vm714, %v705
      %771 = vst.msk [vmem:[%s172 + $0x1c0] sm:$0xff] %vm714, %v706
      %772 = vst.msk [vmem:[%s172 + $0x1c8] sm:$0xff] %vm714, %v707
      %773 = vst.msk [vmem:[%s172 + $0x1d0] sm:$0xff] %vm714, %v708
      %774 = vst.msk [vmem:[%s172 + $0x1d8] sm:$0xff] %vm714, %v709
      %775 = vst.msk [vmem:[%s172 + $0x1e0] sm:$0xff] %vm714, %v710
      %776 = vst.msk [vmem:[%s172 + $0x1e8] sm:$0xff] %vm714, %v711
      %777 = vst.msk [vmem:[%s172 + $0x1f0] sm:$0xff] %vm714, %v712
      %778 = vst.msk [vmem:[%s172 + $0x1f8] sm:$0xff] %vm714, %v713
      %s779 = smul.u32 64, %s14
      %p780 = scmp.lt.s32.totalorder %s779, 255
      %s781 = scalar_select %p780, %s779, 255
      %s782 = smul.addr %s781, 8
      %s783 = scalar_lea.vmem %s3, %s782
      // Predicated region
      $region33: #{tpu_custom_call.1} parent=31 // pred_check
        %p784 = pneg %p100
      $region34: #{tpu_custom_call.1} parent=31 // pred_check_branch
        %786 = sbr.rel (%p784) target = $region36
      $region35: #{tpu_custom_call.1} parent=31 // pred_region
        %s787 = smul.u32 64, %s14
      $region36: #{tpu_custom_call.1} parent=31 // pred_fallthru
        _
    $region32: #{tpu_custom_call.1} parent=5 // pred_fallthru
      _
    %p788 = scmp.le.s32.totalorder 2, %s9
    // Predicated region
    $region37: #{tpu_custom_call.1} parent=5 // pred_check
      %p789 = pneg %p788
    $region38: #{tpu_custom_call.1} parent=5 // pred_check_branch
      %791 = sbr.rel (%p789) target = $region40
    $region39: #{tpu_custom_call.1} parent=5 // pred_region
      %s792 = ssub.s32 %s9, 2
      // Predicated region
      $region41: #{tpu_custom_call.1} parent=39 // pred_check
        %p793 = pneg %p106
      $region42: #{tpu_custom_call.1} parent=39 // pred_check_branch
        %795 = sbr.rel (%p793) target = $region44
      $region43: #{tpu_custom_call.1} parent=39 // pred_region
        %s796 = smul.u32 64, %s15
        %p797 = scmp.lt.s32.totalorder %s796, 255
        %s798 = scalar_select %p797, %s796, 255
        %s799 = smul.addr %s798, 8
        %s800 = scalar_lea.vmem %s3, %s799
      $region44: #{tpu_custom_call.1} parent=39 // pred_fallthru
        _
    $region40: #{tpu_custom_call.1} parent=5 // pred_fallthru
      _
  $region6: #{tpu_custom_call.1} parent=0 // loop_footer
    %s13 = sadd.s32 1, %s9
  $region7: #{tpu_custom_call.1} parent=0 // loop_footer_branch
    %8 = sbr.rel target = $region3
  $region8: #{tpu_custom_call.1} parent=0 // loop_exit
    _

</llo_original>
